<compile_context>
chip_gen: v5e
topology: v5e:2x2
jax: 0.10.0
libtpu: 0.0.40
codegen_flags: <defaults>
</compile_context>

<pallas_src>
import jax
import jax.numpy as jnp
from jax.experimental import pallas as pl
from jax.experimental.pallas import tpu as pltpu


BATCH = 64          # hard-coded by obs_input.view(64, 693) in the PyTorch module
OBS_SHAPE = 693     # hard-coded by the view as well
ACT_SHAPE = 7       # small synthetic action dimension
HIDDEN = 64

# Packed bf16 weight slab layout (all offsets multiples of 16 for bf16 sublane tiling).
W1_OBS_OFF = 0
W1_ACT_OFF = 704                       # 693 rounded up to 16-multiple
W2_OFF = 720                           # 704 + 16
W_ROWS = W2_OFF + HIDDEN               # 784


def critic_kernel(obs_ref, act_ref, w_ref, aux_ref, out_ref):
    """One row-block of the critic MLP, fully VMEM-resident.

    obs_ref : (block_rows, OBS_SHAPE) f32
    act_ref : (block_rows, ACT_SHAPE) f32
    w_ref   : (W_ROWS, HIDDEN)        bf16  packed [w1_obs | pad | w1_act | pad | w2]
    aux_ref : (4, HIDDEN)             f32   row0=b1, row1=b2, row2=w3 (row), row3=[b3,0,..]
    out_ref : (block_rows, 1)         f32
    """
    b1 = aux_ref[0:1, :]          # (1, HIDDEN), broadcasts over the block rows
    b2 = aux_ref[1:2, :]          # (1, HIDDEN)
    w3r = aux_ref[2:3, :]         # (1, HIDDEN)  value-head weight as a row
    b3 = aux_ref[3:4, 0:1]        # (1, 1)       value-head bias

    obs = obs_ref[...]
    act = act_ref[...]

    # linear_c1 on the (fused) concat [obs, act] + LeakyReLU(0.01).
    # bf16 MXU inputs, f32 accumulation; bias add + activation stay in f32.
    h1 = (
        jnp.dot(obs.astype(jnp.bfloat16),
                w_ref[W1_OBS_OFF:W1_OBS_OFF + OBS_SHAPE, :],
                preferred_element_type=jnp.float32)
        + jnp.dot(act.astype(jnp.bfloat16),
                  w_ref[W1_ACT_OFF:W1_ACT_OFF + ACT_SHAPE, :],
                  preferred_element_type=jnp.float32)
        + b1
    )
    h1 = jnp.maximum(h1, 0.01 * h1)     # LeakyReLU(0.01): mul + vmax

    # linear_c2 + LeakyReLU(0.01)
    h2 = jnp.dot(h1.astype(jnp.bfloat16),
                 w_ref[W2_OFF:W2_OFF + HIDDEN, :],
                 preferred_element_type=jnp.float32) + b2
    h2 = jnp.maximum(h2, 0.01 * h2)

    # linear_c (value head): N=1 matmul replaced by VPU multiply + XLU lane reduce.
    # NOTE: output stays a (block_rows, 1) column; lane-dense repack is a low-priority
    # micro-opt for this tiny (N*4 byte) output.
    out_ref[...] = jnp.sum(h2 * w3r, axis=-1, keepdims=True) + b3


def critic_forward(obs_input, act_input, params, *, block_rows=None):
    """Run the critic over all rows in one pallas_call.

    obs_input : (N, 693) or anything reshaping to it  (N = k * 64, k stacked evals)
    act_input : (N, ACT_SHAPE)
    Weights are DMA'd once (constant index_map) and stay VMEM-resident across the grid.
    """
    w_packed, aux = params
    obs = obs_input.reshape(-1, OBS_SHAPE)     # obs_input.view(64, 693) generalized to N rows
    n = obs.shape[0]

    if block_rows is None:
        # Big blocks amortize the ~0.35 us per-grid-step overhead; VMEM is a non-issue
        # (even 1024x693 f32 double-buffered is ~5.7 MiB).
        block_rows = n if n <= 1024 else 512
    assert n % block_rows == 0, (n, block_rows)
    n_blocks = n // block_rows

    flops = 2 * n * ((OBS_SHAPE + ACT_SHAPE) * HIDDEN + HIDDEN * HIDDEN + HIDDEN)
    bytes_accessed = (obs.size * 4 + act_input.size * 4
                      + W_ROWS * HIDDEN * 2 + 4 * HIDDEN * 4 + n * 4)

    grid_spec = pltpu.PrefetchScalarGridSpec(
        num_scalar_prefetch=0,
        grid=(n_blocks,),
        in_specs=[
            pl.BlockSpec((block_rows, OBS_SHAPE), lambda i: (i, 0)),
            pl.BlockSpec((block_rows, ACT_SHAPE), lambda i: (i, 0)),
            pl.BlockSpec((W_ROWS, HIDDEN), lambda i: (0, 0)),   # weights VMEM-resident
            pl.BlockSpec((4, HIDDEN), lambda i: (0, 0)),        # aux VMEM-resident
        ],
        out_specs=pl.BlockSpec((block_rows, 1), lambda i: (i, 0)),
    )

    return pl.pallas_call(
        critic_kernel,
        out_shape=jax.ShapeDtypeStruct((n, 1), jnp.float32),
        grid_spec=grid_spec,
        compiler_params=pltpu.CompilerParams(
            dimension_semantics=("parallel",),      # v7x: both TensorCores split the grid
        ),
        cost_estimate=pl.CostEstimate(
            flops=flops, transcendentals=0, bytes_accessed=bytes_accessed),
    )(obs, act_input, w_packed, aux)


def init_params(key):
    """PyTorch-Linear-style init U(-1/sqrt(fan_in), 1/sqrt(fan_in)), repacked into the
    kernel layout: one aligned bf16 weight slab + one packed f32 aux array."""
    def uni(k, shape, fan_in):
        bound = 1.0 / jnp.sqrt(jnp.float32(fan_in))
        return jax.random.uniform(k, shape, jnp.float32, -bound, bound)

    k1w, k1b, k2w, k2b, k3w, k3b = jax.random.split(key, 6)
    fan1 = OBS_SHAPE + ACT_SHAPE
    w1 = uni(k1w, (fan1, HIDDEN), fan1)     # (in, out) layout = PyTorch weight.T
    b1 = uni(k1b, (HIDDEN,), fan1)
    w2 = uni(k2w, (HIDDEN, HIDDEN), HIDDEN)
    b2 = uni(k2b, (HIDDEN,), HIDDEN)
    w3 = uni(k3w, (HIDDEN, 1), HIDDEN)
    b3 = uni(k3b, (1,), HIDDEN)

    # Pack [w1_obs | pad | w1_act | pad | w2] into one 16-row-aligned bf16 slab.
    pad1 = jnp.zeros((W1_ACT_OFF - OBS_SHAPE, HIDDEN), jnp.float32)              # rows 693..703
    pad2 = jnp.zeros((W2_OFF - (W1_ACT_OFF + ACT_SHAPE), HIDDEN), jnp.float32)   # rows 711..719
    w_packed = jnp.concatenate(
        [w1[:OBS_SHAPE], pad1, w1[OBS_SHAPE:], pad2, w2], axis=0
    ).astype(jnp.bfloat16)
    assert w_packed.shape == (W_ROWS, HIDDEN)

    # Pack all tiny f32 operands into one (4, HIDDEN) array (single DMA instead of 4).
    aux = jnp.zeros((4, HIDDEN), jnp.float32)
    aux = aux.at[0].set(b1).at[1].set(b2).at[2].set(w3[:, 0]).at[3, 0].set(b3[0])

    return (w_packed, aux)


def _unpack(params):
    w_packed, aux = params
    w1o = w_packed[W1_OBS_OFF:W1_OBS_OFF + OBS_SHAPE]
    w1a = w_packed[W1_ACT_OFF:W1_ACT_OFF + ACT_SHAPE]
    w2 = w_packed[W2_OFF:W2_OFF + HIDDEN]
    return w1o, w1a, w2, aux


def critic_reference_mimic(obs_input, act_input, params):
    """Pure-JAX reference mirroring the kernel's bf16-input / f32-accum math."""
    w1o, w1a, w2, aux = _unpack(params)
    obs = obs_input.reshape(-1, OBS_SHAPE)
    b1, b2, w3r, b3 = aux[0:1, :], aux[1:2, :], aux[2:3, :], aux[3:4, 0:1]
    h1 = (jnp.dot(obs.astype(jnp.bfloat16), w1o, preferred_element_type=jnp.float32)
          + jnp.dot(act_input.astype(jnp.bfloat16), w1a, preferred_element_type=jnp.float32)
          + b1)
    h1 = jnp.maximum(h1, 0.01 * h1)
    h2 = jnp.dot(h1.astype(jnp.bfloat16), w2, preferred_element_type=jnp.float32) + b2
    h2 = jnp.maximum(h2, 0.01 * h2)
    return jnp.sum(h2 * w3r, axis=-1, keepdims=True) + b3


def critic_reference_f32(obs_input, act_input, params):
    """Full-precision reference matching the original PyTorch module semantics."""
    w1o, w1a, w2, aux = _unpack(params)
    obs = obs_input.reshape(-1, OBS_SHAPE)
    b1, b2, w3r, b3 = aux[0], aux[1], aux[2], aux[3, 0]
    x = jnp.concatenate([obs, act_input], axis=1)
    w1 = jnp.concatenate([w1o.astype(jnp.float32), w1a.astype(jnp.float32)], axis=0)
    h1 = x @ w1 + b1
    h1 = jnp.where(h1 >= 0.0, h1, 0.01 * h1)
    h2 = h1 @ w2.astype(jnp.float32) + b2
    h2 = jnp.where(h2 >= 0.0, h2, 0.01 * h2)
    return h2 @ w3r[:, None] + b3


if __name__ == "__main__":
    key = jax.random.PRNGKey(0)
    k_obs, k_act, k_par, k_obs_b, k_act_b = jax.random.split(key, 5)

    params = init_params(k_par)

    # --- Single module-spec call: batch 64 (obs_input.view(64, 693)) ---
    obs_input = jax.random.normal(k_obs, (BATCH, OBS_SHAPE), jnp.float32)
    act_input = jax.random.normal(k_act, (BATCH, ACT_SHAPE), jnp.float32)

    out = critic_forward(obs_input, act_input, params)
    out = jax.block_until_ready(out)
    assert out.shape == (BATCH, 1), out.shape

    ref_mimic = critic_reference_mimic(obs_input, act_input, params)
    assert jnp.allclose(out, ref_mimic, atol=1e-2, rtol=1e-2), "mismatch vs mimic reference"
    ref_f32 = critic_reference_f32(obs_input, act_input, params)
    assert jnp.allclose(out, ref_f32, atol=5e-2, rtol=5e-2), "mismatch vs f32 reference"

    # --- Batched/grid path: 8 stacked 64-row evals in ONE pallas_call,
    #     256-row blocks, weights pinned VMEM-resident across the grid. ---
    N_STACK = 8
    obs_big = jax.random.normal(k_obs_b, (N_STACK * BATCH, OBS_SHAPE), jnp.float32)
    act_big = jax.random.normal(k_act_b, (N_STACK * BATCH, ACT_SHAPE), jnp.float32)

    out_big = critic_forward(obs_big, act_big, params, block_rows=256)
    out_big = jax.block_until_ready(out_big)
    assert out_big.shape == (N_STACK * BATCH, 1), out_big.shape

    ref_big = critic_reference_mimic(obs_big, act_big, params)
    assert jnp.allclose(out_big, ref_big, atol=1e-2, rtol=1e-2), "mismatch (batched grid)"

    print("KERNEL_OK")
</pallas_src>

<mosaic_0001>
module attributes {stable_mosaic.version = 11 : i64} {
  func.func @critic_kernel(%arg0: i32, %arg1: memref<64x693xf32, #tpu.memory_space<vmem>>, %arg2: memref<64x7xf32, #tpu.memory_space<vmem>>, %arg3: memref<784x64xbf16, #tpu.memory_space<vmem>>, %arg4: memref<4x64xf32, #tpu.memory_space<vmem>>, %arg5: memref<64x1xf32, #tpu.memory_space<vmem>>) attributes {dimension_semantics = [#tpu.dimension_semantics<parallel>], iteration_bounds = array<i64: 1>, scalar_prefetch = 0 : i64, scratch_operands = 0 : i64, tpu.core_type = #tpu.core_type<tc>, window_params = [{transform_indices = @transform_0, window_bounds = array<i64: 64, 693>}, {transform_indices = @transform_1, window_bounds = array<i64: 64, 7>}, {pipeline_mode = #tpu.pipeline_mode<synchronous>, transform_indices = @transform_2, window_bounds = array<i64: 784, 64>}, {pipeline_mode = #tpu.pipeline_mode<synchronous>, transform_indices = @transform_3, window_bounds = array<i64: 4, 64>}, {transform_indices = @transform_4, window_bounds = array<i64: 64, 1>}]} {
    %c0 = arith.constant 0 : index
    %c0_0 = arith.constant 0 : index
    %0 = vector.load %arg4[%c0, %c0_0] : memref<4x64xf32, #tpu.memory_space<vmem>>, vector<1x64xf32>
    %c1 = arith.constant 1 : index
    %c0_1 = arith.constant 0 : index
    %1 = vector.load %arg4[%c1, %c0_1] : memref<4x64xf32, #tpu.memory_space<vmem>>, vector<1x64xf32>
    %c2 = arith.constant 2 : index
    %c0_2 = arith.constant 0 : index
    %2 = vector.load %arg4[%c2, %c0_2] : memref<4x64xf32, #tpu.memory_space<vmem>>, vector<1x64xf32>
    %c3 = arith.constant 3 : index
    %c0_3 = arith.constant 0 : index
    %3 = vector.load %arg4[%c3, %c0_3] : memref<4x64xf32, #tpu.memory_space<vmem>>, vector<1x1xf32>
    %c0_4 = arith.constant 0 : index
    %c0_5 = arith.constant 0 : index
    %4 = vector.load %arg1[%c0_4, %c0_5] : memref<64x693xf32, #tpu.memory_space<vmem>>, vector<64x693xf32>
    %c0_6 = arith.constant 0 : index
    %c0_7 = arith.constant 0 : index
    %5 = vector.load %arg2[%c0_6, %c0_7] : memref<64x7xf32, #tpu.memory_space<vmem>>, vector<64x7xf32>
    %6 = arith.truncf %4 : vector<64x693xf32> to vector<64x693xbf16>
    %c0_8 = arith.constant 0 : index
    %c0_9 = arith.constant 0 : index
    %7 = vector.load %arg3[%c0_8, %c0_9] : memref<784x64xbf16, #tpu.memory_space<vmem>>, vector<693x64xbf16>
    %cst = arith.constant dense<0.000000e+00> : vector<64x64xf32>
    %8 = tpu.matmul %6, %7, %cst {dimension_numbers = #tpu.dot_dimension_numbers<[1], [0], [0], [1], [0, 0, 1, 1], [], []>} : vector<64x693xbf16>, vector<693x64xbf16>, vector<64x64xf32> -> vector<64x64xf32>
    %9 = arith.truncf %5 : vector<64x7xf32> to vector<64x7xbf16>
    %c704 = arith.constant 704 : index
    %c0_10 = arith.constant 0 : index
    %10 = vector.load %arg3[%c704, %c0_10] : memref<784x64xbf16, #tpu.memory_space<vmem>>, vector<7x64xbf16>
    %cst_11 = arith.constant dense<0.000000e+00> : vector<64x64xf32>
    %11 = tpu.matmul %9, %10, %cst_11 {dimension_numbers = #tpu.dot_dimension_numbers<[1], [0], [0], [1], [0, 0, 1, 1], [], []>} : vector<64x7xbf16>, vector<7x64xbf16>, vector<64x64xf32> -> vector<64x64xf32>
    %12 = arith.addf %8, %11 : vector<64x64xf32>
    %13 = vector.broadcast %0 : vector<1x64xf32> to vector<64x64xf32>
    %14 = arith.addf %12, %13 : vector<64x64xf32>
    %cst_12 = arith.constant 0.00999999977 : f32
    %15 = vector.broadcast %cst_12 : f32 to vector<64x64xf32>
    %16 = arith.mulf %15, %14 : vector<64x64xf32>
    %17 = arith.maximumf %14, %16 : vector<64x64xf32>
    %18 = arith.truncf %17 : vector<64x64xf32> to vector<64x64xbf16>
    %c720 = arith.constant 720 : index
    %c0_13 = arith.constant 0 : index
    %19 = vector.load %arg3[%c720, %c0_13] : memref<784x64xbf16, #tpu.memory_space<vmem>>, vector<64x64xbf16>
    %cst_14 = arith.constant dense<0.000000e+00> : vector<64x64xf32>
    %20 = tpu.matmul %18, %19, %cst_14 {dimension_numbers = #tpu.dot_dimension_numbers<[1], [0], [0], [1], [0, 0, 1, 1], [], []>} : vector<64x64xbf16>, vector<64x64xbf16>, vector<64x64xf32> -> vector<64x64xf32>
    %21 = vector.broadcast %1 : vector<1x64xf32> to vector<64x64xf32>
    %22 = arith.addf %20, %21 : vector<64x64xf32>
    %cst_15 = arith.constant 0.00999999977 : f32
    %23 = vector.broadcast %cst_15 : f32 to vector<64x64xf32>
    %24 = arith.mulf %23, %22 : vector<64x64xf32>
    %25 = arith.maximumf %22, %24 : vector<64x64xf32>
    %26 = vector.broadcast %2 : vector<1x64xf32> to vector<64x64xf32>
    %27 = arith.mulf %25, %26 : vector<64x64xf32>
    %cst_16 = arith.constant dense<0.000000e+00> : vector<64xf32>
    %28 = vector.multi_reduction <add>, %27, %cst_16 [1] : vector<64x64xf32> to vector<64xf32>
    %29 = vector.shape_cast %28 : vector<64xf32> to vector<64x1xf32>
    %30 = vector.broadcast %3 : vector<1x1xf32> to vector<64x1xf32>
    %31 = arith.addf %29, %30 : vector<64x1xf32>
    %c0_17 = arith.constant 0 : index
    %c0_18 = arith.constant 0 : index
    %32 = vector.load %arg5[%c0_17, %c0_18] : memref<64x1xf32, #tpu.memory_space<vmem>>, vector<64x1xf32>
    tpu.vector_store %arg5[%c0_17, %c0_18], %31 {strides = array<i32>} : memref<64x1xf32, #tpu.memory_space<vmem>>, vector<64x1xf32>,
    return
  }
  func.func @transform_0(%arg0: i32) -> (i32, i32) {
    %c0_i32 = arith.constant 0 : i32
    %c0_i32_0 = arith.constant 0 : i32
    return %arg0, %c0_i32 : i32, i32
  }
  func.func @transform_1(%arg0: i32) -> (i32, i32) {
    %c0_i32 = arith.constant 0 : i32
    %c0_i32_0 = arith.constant 0 : i32
    return %arg0, %c0_i32 : i32, i32
  }
  func.func @transform_2(%arg0: i32) -> (i32, i32) {
    %c0_i32 = arith.constant 0 : i32
    %c0_i32_0 = arith.constant 0 : i32
    %c0_i32_1 = arith.constant 0 : i32
    return %c0_i32, %c0_i32_0 : i32, i32
  }
  func.func @transform_3(%arg0: i32) -> (i32, i32) {
    %c0_i32 = arith.constant 0 : i32
    %c0_i32_0 = arith.constant 0 : i32
    %c0_i32_1 = arith.constant 0 : i32
    return %c0_i32, %c0_i32_0 : i32, i32
  }
  func.func @transform_4(%arg0: i32) -> (i32, i32) {
    %c0_i32 = arith.constant 0 : i32
    %c0_i32_0 = arith.constant 0 : i32
    return %arg0, %c0_i32 : i32, i32
  }
}

</mosaic_0001>

<llo_original>
// kernel: tpu_custom_call.1
$region0: #{tpu_custom_call.1}
  #allocation0 [shape = 'u32[]', space=smem, size = 0x4, offset = 0x4, fixed_abs, tag = 'smem constant byte address 0x4 - core index']
  #allocation1 [shape = 'u32[72,128]{1,0:T(1,128)}', space=vmem, size = 0x9000, scoped, tag = 'internal scratch']
  %s0 = inlined_call_operand.vmem [shape: f32[64,693], index: 0, kind: input, shape index: {}]
  %s1 = inlined_call_operand.vmem [shape: f32[64,7], index: 1, kind: input, shape index: {}]
  %s2 = inlined_call_operand.vmem [shape: bf16[784,64], index: 2, kind: input, shape index: {}]
  %s3 = inlined_call_operand.vmem [shape: f32[4,64], index: 3, kind: input, shape index: {}]
  %s4 = inlined_call_operand.vmem [shape: f32[64,1], index: 4, kind: output, shape index: {}]
  %s5 = sld [smem:[#allocation0]]
  $region26: #{tpu_custom_call.1} parent=0
    _
  %s7 = ssub.s32 1, %s5
  %s8 = scalar_select 0, %s7, %s5
  // Predicated region
  $region2: #{tpu_custom_call.1} parent=0 // pred_check
    _
  $region3: #{tpu_custom_call.1} parent=0 // pred_check_branch
    %10 = sbr.rel (0) target = $region5
  $region4: #{tpu_custom_call.1} parent=0 // pred_region
    _
  $region5: #{tpu_custom_call.1} parent=0 // pred_fallthru
    _
  // Predicated region
  $region6: #{tpu_custom_call.1} parent=0 // pred_check
    _
  $region7: #{tpu_custom_call.1} parent=0 // pred_check_branch
    %12 = sbr.rel (0) target = $region9
  $region8: #{tpu_custom_call.1} parent=0 // pred_region
    _
  $region9: #{tpu_custom_call.1} parent=0 // pred_fallthru
    _
  // Predicated region
  $region10: #{tpu_custom_call.1} parent=0 // pred_check
    _
  $region11: #{tpu_custom_call.1} parent=0 // pred_check_branch
    %14 = sbr.rel (0) target = $region13
  $region12: #{tpu_custom_call.1} parent=0 // pred_region
    _
  $region13: #{tpu_custom_call.1} parent=0 // pred_fallthru
    _
  // Predicated region
  $region14: #{tpu_custom_call.1} parent=0 // pred_check
    _
  $region15: #{tpu_custom_call.1} parent=0 // pred_check_branch
    %16 = sbr.rel (0) target = $region17
  $region16: #{tpu_custom_call.1} parent=0 // pred_region
    _
  $region17: #{tpu_custom_call.1} parent=0 // pred_fallthru
    _
  %v18 = vld [vmem:[%s3] sm:$0x1]
  %v19 = vld [vmem:[%s3 + $0x1] sm:$0x1]
  %v20 = vld [vmem:[%s3 + $0x2] sm:$0x1]
  %v21 = vld [vmem:[%s3 + $0x3] sm:$0x1]
  %v22 = vld [vmem:[%s0] sm:$0xff]
  %v23 = vld [vmem:[%s0 + $0x8] sm:$0xff]
  %v24 = vld [vmem:[%s0 + $0x10] sm:$0xff]
  %v25 = vld [vmem:[%s0 + $0x18] sm:$0xff]
  %v26 = vld [vmem:[%s0 + $0x20] sm:$0xff]
  %v27 = vld [vmem:[%s0 + $0x28] sm:$0xff]
  %v28 = vld [vmem:[%s0 + $0x30] sm:$0xff]
  %v29 = vld [vmem:[%s0 + $0x38] sm:$0xff]
  %v30 = vld [vmem:[%s0 + $0x40] sm:$0xff]
  %v31 = vld [vmem:[%s0 + $0x48] sm:$0xff]
  %v32 = vld [vmem:[%s0 + $0x50] sm:$0xff]
  %v33 = vld [vmem:[%s0 + $0x58] sm:$0xff]
  %v34 = vld [vmem:[%s0 + $0x60] sm:$0xff]
  %v35 = vld [vmem:[%s0 + $0x68] sm:$0xff]
  %v36 = vld [vmem:[%s0 + $0x70] sm:$0xff]
  %v37 = vld [vmem:[%s0 + $0x78] sm:$0xff]
  %v38 = vld [vmem:[%s0 + $0x80] sm:$0xff]
  %v39 = vld [vmem:[%s0 + $0x88] sm:$0xff]
  %v40 = vld [vmem:[%s0 + $0x90] sm:$0xff]
  %v41 = vld [vmem:[%s0 + $0x98] sm:$0xff]
  %v42 = vld [vmem:[%s0 + $0xa0] sm:$0xff]
  %v43 = vld [vmem:[%s0 + $0xa8] sm:$0xff]
  %v44 = vld [vmem:[%s0 + $0xb0] sm:$0xff]
  %v45 = vld [vmem:[%s0 + $0xb8] sm:$0xff]
  %v46 = vld [vmem:[%s0 + $0xc0] sm:$0xff]
  %v47 = vld [vmem:[%s0 + $0xc8] sm:$0xff]
  %v48 = vld [vmem:[%s0 + $0xd0] sm:$0xff]
  %v49 = vld [vmem:[%s0 + $0xd8] sm:$0xff]
  %v50 = vld [vmem:[%s0 + $0xe0] sm:$0xff]
  %v51 = vld [vmem:[%s0 + $0xe8] sm:$0xff]
  %v52 = vld [vmem:[%s0 + $0xf0] sm:$0xff]
  %v53 = vld [vmem:[%s0 + $0xf8] sm:$0xff]
  %v54 = vld [vmem:[%s0 + $0x100] sm:$0xff]
  %v55 = vld [vmem:[%s0 + $0x108] sm:$0xff]
  %v56 = vld [vmem:[%s0 + $0x110] sm:$0xff]
  %v57 = vld [vmem:[%s0 + $0x118] sm:$0xff]
  %v58 = vld [vmem:[%s0 + $0x120] sm:$0xff]
  %v59 = vld [vmem:[%s0 + $0x128] sm:$0xff]
  %v60 = vld [vmem:[%s0 + $0x130] sm:$0xff]
  %v61 = vld [vmem:[%s0 + $0x138] sm:$0xff]
  %v62 = vld [vmem:[%s0 + $0x140] sm:$0xff]
  %v63 = vld [vmem:[%s0 + $0x148] sm:$0xff]
  %v64 = vld [vmem:[%s0 + $0x150] sm:$0xff]
  %v65 = vld [vmem:[%s0 + $0x158] sm:$0xff]
  %v66 = vld [vmem:[%s0 + $0x160] sm:$0xff]
  %v67 = vld [vmem:[%s0 + $0x168] sm:$0xff]
  %v68 = vld [vmem:[%s0 + $0x170] sm:$0xff]
  %v69 = vld [vmem:[%s0 + $0x178] sm:$0xff]
  %v70 = vld [vmem:[%s1] sm:$0xff]
  %v71 = vld [vmem:[%s1 + $0x8] sm:$0xff]
  %v72 = vld [vmem:[%s1 + $0x10] sm:$0xff]
  %v73 = vld [vmem:[%s1 + $0x18] sm:$0xff]
  %v74 = vld [vmem:[%s1 + $0x20] sm:$0xff]
  %v75 = vld [vmem:[%s1 + $0x28] sm:$0xff]
  %v76 = vld [vmem:[%s1 + $0x30] sm:$0xff]
  %v77 = vld [vmem:[%s1 + $0x38] sm:$0xff]
  %v78 = vpack.c.bf16 %v28, %v22
  %v79 = vpack.c.bf16 %v29, %v23
  %v80 = vpack.c.bf16 %v30, %v24
  %v81 = vpack.c.bf16 %v31, %v25
  %v82 = vpack.c.bf16 %v32, %v26
  %v83 = vpack.c.bf16 %v33, %v27
  %v84 = vpack.c.bf16 %v40, %v34
  %v85 = vpack.c.bf16 %v41, %v35
  %v86 = vpack.c.bf16 %v42, %v36
  %v87 = vpack.c.bf16 %v43, %v37
  %v88 = vpack.c.bf16 %v44, %v38
  %v89 = vpack.c.bf16 %v45, %v39
  %v90 = vpack.c.bf16 %v52, %v46
  %v91 = vpack.c.bf16 %v53, %v47
  %v92 = vpack.c.bf16 %v54, %v48
  %v93 = vpack.c.bf16 %v55, %v49
  %v94 = vpack.c.bf16 %v56, %v50
  %v95 = vpack.c.bf16 %v57, %v51
  %v96 = vpack.c.bf16 %v64, %v58
  %v97 = vpack.c.bf16 %v65, %v59
  %v98 = vpack.c.bf16 %v66, %v60
  %v99 = vpack.c.bf16 %v67, %v61
  %v100 = vpack.c.bf16 %v68, %v62
  %v101 = vpack.c.bf16 %v69, %v63
  %v102 = vld [vmem:[%s2] sm:$0xf]
  %v103 = vld [vmem:[%s2 + $0x4] sm:$0xf]
  %v104 = vld [vmem:[%s2 + $0x8] sm:$0xf]
  %v105 = vld [vmem:[%s2 + $0xc] sm:$0xf]
  %v106 = vld [vmem:[%s2 + $0x10] sm:$0xf]
  %v107 = vld [vmem:[%s2 + $0x14] sm:$0xf]
  %v108 = vld [vmem:[%s2 + $0x18] sm:$0xf]
  %v109 = vld [vmem:[%s2 + $0x1c] sm:$0xf]
  %v110 = vld [vmem:[%s2 + $0x20] sm:$0xf]
  %v111 = vld [vmem:[%s2 + $0x24] sm:$0xf]
  %v112 = vld [vmem:[%s2 + $0x28] sm:$0xf]
  %v113 = vld [vmem:[%s2 + $0x2c] sm:$0xf]
  %v114 = vld [vmem:[%s2 + $0x30] sm:$0xf]
  %v115 = vld [vmem:[%s2 + $0x34] sm:$0xf]
  %v116 = vld [vmem:[%s2 + $0x38] sm:$0xf]
  %v117 = vld [vmem:[%s2 + $0x3c] sm:$0xf]
  %v118 = vld [vmem:[%s2 + $0x40] sm:$0xf]
  %v119 = vld [vmem:[%s2 + $0x44] sm:$0xf]
  %v120 = vld [vmem:[%s2 + $0x48] sm:$0xf]
  %v121 = vld [vmem:[%s2 + $0x4c] sm:$0xf]
  %v122 = vld [vmem:[%s2 + $0x50] sm:$0xf]
  %v123 = vld [vmem:[%s2 + $0x54] sm:$0xf]
  %v124 = vld [vmem:[%s2 + $0x58] sm:$0xf]
  %v125 = vld [vmem:[%s2 + $0x5c] sm:$0xf]
  %v126 = vld [vmem:[%s2 + $0x60] sm:$0xf]
  %v127 = vld [vmem:[%s2 + $0x64] sm:$0xf]
  %v128 = vld [vmem:[%s2 + $0x68] sm:$0xf]
  %v129 = vld [vmem:[%s2 + $0x6c] sm:$0xf]
  %v130 = vld [vmem:[%s2 + $0x70] sm:$0xf]
  %v131 = vld [vmem:[%s2 + $0x74] sm:$0xf]
  %v132 = vld [vmem:[%s2 + $0x78] sm:$0xf]
  %v133 = vld [vmem:[%s2 + $0x7c] sm:$0xf]
  %v134 = vld [vmem:[%s2 + $0x80] sm:$0xf]
  %v135 = vld [vmem:[%s2 + $0x84] sm:$0xf]
  %v136 = vld [vmem:[%s2 + $0x88] sm:$0xf]
  %v137 = vld [vmem:[%s2 + $0x8c] sm:$0xf]
  %v138 = vld [vmem:[%s2 + $0x90] sm:$0xf]
  %v139 = vld [vmem:[%s2 + $0x94] sm:$0xf]
  %v140 = vld [vmem:[%s2 + $0x98] sm:$0xf]
  %v141 = vld [vmem:[%s2 + $0x9c] sm:$0xf]
  %v142 = vld [vmem:[%s2 + $0xa0] sm:$0xf]
  %v143 = vld [vmem:[%s2 + $0xa4] sm:$0xf]
  %v144 = vld [vmem:[%s2 + $0xa8] sm:$0xf]
  %v145 = vld [vmem:[%s2 + $0xac] sm:$0xf]
  %v146 = vld [vmem:[%s2 + $0xb0] sm:$0xf]
  %v147 = vld [vmem:[%s2 + $0xb4] sm:$0xf]
  %v148 = vld [vmem:[%s2 + $0xb8] sm:$0xf]
  %v149 = vld [vmem:[%s2 + $0xbc] sm:$0xf]
  %v150 = vld [vmem:[%s2 + $0xc0] sm:$0xf]
  %v151 = vld [vmem:[%s2 + $0xc4] sm:$0xf]
  %v152 = vld [vmem:[%s2 + $0xc8] sm:$0xf]
  %v153 = vld [vmem:[%s2 + $0xcc] sm:$0xf]
  %v154 = vld [vmem:[%s2 + $0xd0] sm:$0xf]
  %v155 = vld [vmem:[%s2 + $0xd4] sm:$0xf]
  %v156 = vld [vmem:[%s2 + $0xd8] sm:$0xf]
  %v157 = vld [vmem:[%s2 + $0xdc] sm:$0xf]
  %v158 = vld [vmem:[%s2 + $0xe0] sm:$0xf]
  %v159 = vld [vmem:[%s2 + $0xe4] sm:$0xf]
  %v160 = vld [vmem:[%s2 + $0xe8] sm:$0xf]
  %v161 = vld [vmem:[%s2 + $0xec] sm:$0xf]
  %v162 = vld [vmem:[%s2 + $0xf0] sm:$0xf]
  %v163 = vld [vmem:[%s2 + $0xf4] sm:$0xf]
  %v164 = vld [vmem:[%s2 + $0xf8] sm:$0xf]
  %v165 = vld [vmem:[%s2 + $0xfc] sm:$0xf]
  %v166 = vld [vmem:[%s2 + $0x100] sm:$0xf]
  %v167 = vld [vmem:[%s2 + $0x104] sm:$0xf]
  %v168 = vld [vmem:[%s2 + $0x108] sm:$0xf]
  %v169 = vld [vmem:[%s2 + $0x10c] sm:$0xf]
  %v170 = vld [vmem:[%s2 + $0x110] sm:$0xf]
  %v171 = vld [vmem:[%s2 + $0x114] sm:$0xf]
  %v172 = vld [vmem:[%s2 + $0x118] sm:$0xf]
  %v173 = vld [vmem:[%s2 + $0x11c] sm:$0xf]
  %v174 = vld [vmem:[%s2 + $0x120] sm:$0xf]
  %v175 = vld [vmem:[%s2 + $0x124] sm:$0xf]
  %v176 = vld [vmem:[%s2 + $0x128] sm:$0xf]
  %v177 = vld [vmem:[%s2 + $0x12c] sm:$0xf]
  %v178 = vld [vmem:[%s2 + $0x130] sm:$0xf]
  %v179 = vld [vmem:[%s2 + $0x134] sm:$0xf]
  %v180 = vld [vmem:[%s2 + $0x138] sm:$0xf]
  %v181 = vld [vmem:[%s2 + $0x13c] sm:$0xf]
  %v182 = vld [vmem:[%s2 + $0x140] sm:$0xf]
  %v183 = vld [vmem:[%s2 + $0x144] sm:$0xf]
  %v184 = vld [vmem:[%s2 + $0x148] sm:$0xf]
  %v185 = vld [vmem:[%s2 + $0x14c] sm:$0xf]
  %v186 = vld [vmem:[%s2 + $0x150] sm:$0xf]
  %v187 = vld [vmem:[%s2 + $0x154] sm:$0xf]
  %v188 = vld [vmem:[%s2 + $0x158] sm:$0x7]
  %v189 = vpack.c.bf16 %v71, %v70
  %v190 = vpack.c.bf16 %v73, %v72
  %v191 = vpack.c.bf16 %v75, %v74
  %v192 = vpack.c.bf16 %v77, %v76
  %v193 = vld [vmem:[%s2 + $0x160] sm:$0xf]
  %vm194 = vcmask 56320
  %v196 = vsel %vm194, %v189, 0
  %v199 = vsel %vm194, %v190, 0
  %v202 = vsel %vm194, %v191, 0
  %v205 = vsel %vm194, %v192, 0
  %vm207 = vcmask 1042432
  %vm208 = vcmask 1043456
  %v209 = vsel %vm207, 4294967295, 65535
  %v210 = vsel %vm208, %v209, 0
  %v212 = vand.u32 %v193, %v210
  %214 = vmatpush.bf16.msra.mxu0 0
  %215 = vmatpush.bf16.msra.mxu0 0
  %216 = vmatpush.bf16.msra.mxu0 0
  %217 = vmatpush.bf16.msra.mxu0 0
  %218 = vmatpush.bf16.msra.mxu0 0
  %219 = vmatpush.bf16.msra.mxu0 0
  %220 = vmatpush.bf16.msra.mxu0 0
  %221 = vmatpush.bf16.msra.mxu0 %v212
  %222 = vmatmul.bf16.gmra.mxu0 %v196
  %v223 = vpop.f32.mrf.mxu0
  %v224 = vadd.f32 0.0, %v223
  %v225 = vpop.f32.mrf.mxu0
  %v226 = vadd.f32 0.0, %v225
  %227 = vmatmul.bf16.gmra.mxu0 %v199
  %v228 = vpop.f32.mrf.mxu0
  %v229 = vadd.f32 0.0, %v228
  %v230 = vpop.f32.mrf.mxu0
  %v231 = vadd.f32 0.0, %v230
  %232 = vmatmul.bf16.gmra.mxu0 %v202
  %v233 = vpop.f32.mrf.mxu0
  %v234 = vadd.f32 0.0, %v233
  %v235 = vpop.f32.mrf.mxu0
  %v236 = vadd.f32 0.0, %v235
  %237 = vmatmul.bf16.gmra.mxu0 %v205
  %v238 = vpop.f32.mrf.mxu0
  %v239 = vadd.f32 0.0, %v238
  %v240 = vpop.f32.mrf.mxu0
  %v241 = vadd.f32 0.0, %v240
  %242 = vdwg.mxu0
  %v330 = vunpack.c.l.b16 %v102
  %v331 = vunpack.c.l.b16 %v103
  %v332 = vunpack.c.l.b16 %v104
  %v333 = vunpack.c.l.b16 %v105
  %v334 = vunpack.c.l.b16 %v106
  %v335 = vunpack.c.l.b16 %v107
  %v336 = vunpack.c.l.b16 %v108
  %v337 = vunpack.c.l.b16 %v109
  %v338 = vunpack.c.l.b16 %v110
  %v339 = vunpack.c.l.b16 %v111
  %v340 = vunpack.c.l.b16 %v112
  %v341 = vunpack.c.l.b16 %v113
  %v342 = vunpack.c.l.b16 %v114
  %v343 = vunpack.c.l.b16 %v115
  %v344 = vunpack.c.l.b16 %v116
  %v345 = vunpack.c.l.b16 %v117
  %v346 = vunpack.c.l.b16 %v118
  %v347 = vunpack.c.l.b16 %v119
  %v348 = vunpack.c.l.b16 %v120
  %v349 = vunpack.c.l.b16 %v121
  %v350 = vunpack.c.l.b16 %v122
  %v351 = vunpack.c.l.b16 %v123
  %v352 = vunpack.c.l.b16 %v124
  %v353 = vunpack.c.l.b16 %v125
  %v354 = vunpack.c.l.b16 %v126
  %v355 = vunpack.c.l.b16 %v127
  %v356 = vunpack.c.l.b16 %v128
  %v357 = vunpack.c.l.b16 %v129
  %v358 = vunpack.c.l.b16 %v130
  %v359 = vunpack.c.l.b16 %v131
  %v360 = vunpack.c.l.b16 %v132
  %v361 = vunpack.c.l.b16 %v133
  %v362 = vunpack.c.l.b16 %v134
  %v363 = vunpack.c.l.b16 %v135
  %v364 = vunpack.c.l.b16 %v136
  %v365 = vunpack.c.l.b16 %v137
  %v366 = vunpack.c.l.b16 %v138
  %v367 = vunpack.c.l.b16 %v139
  %v368 = vunpack.c.l.b16 %v140
  %v369 = vunpack.c.l.b16 %v141
  %v370 = vunpack.c.l.b16 %v142
  %v371 = vunpack.c.l.b16 %v143
  %v372 = vunpack.c.l.b16 %v144
  %v373 = vunpack.c.l.b16 %v145
  %v374 = vunpack.c.l.b16 %v146
  %v375 = vunpack.c.l.b16 %v147
  %v376 = vunpack.c.l.b16 %v148
  %v377 = vunpack.c.l.b16 %v149
  %v378 = vunpack.c.l.b16 %v150
  %v379 = vunpack.c.l.b16 %v151
  %v380 = vunpack.c.l.b16 %v152
  %v381 = vunpack.c.l.b16 %v153
  %v382 = vunpack.c.l.b16 %v154
  %v383 = vunpack.c.l.b16 %v155
  %v384 = vunpack.c.l.b16 %v156
  %v385 = vunpack.c.l.b16 %v157
  %v386 = vunpack.c.l.b16 %v158
  %v387 = vunpack.c.l.b16 %v159
  %v388 = vunpack.c.l.b16 %v160
  %v389 = vunpack.c.l.b16 %v161
  %v390 = vunpack.c.l.b16 %v162
  %v391 = vunpack.c.l.b16 %v163
  %v392 = vunpack.c.l.b16 %v164
  %v393 = vunpack.c.l.b16 %v165
  %v394 = vunpack.c.l.b16 %v166
  %v395 = vunpack.c.l.b16 %v167
  %v396 = vunpack.c.l.b16 %v168
  %v397 = vunpack.c.l.b16 %v169
  %v398 = vunpack.c.l.b16 %v170
  %v399 = vunpack.c.l.b16 %v171
  %v400 = vunpack.c.l.b16 %v172
  %v401 = vunpack.c.l.b16 %v173
  %v402 = vunpack.c.l.b16 %v174
  %v403 = vunpack.c.l.b16 %v175
  %v404 = vunpack.c.l.b16 %v176
  %v405 = vunpack.c.l.b16 %v177
  %v406 = vunpack.c.l.b16 %v178
  %v407 = vunpack.c.l.b16 %v179
  %v408 = vunpack.c.l.b16 %v180
  %v409 = vunpack.c.l.b16 %v181
  %v410 = vunpack.c.l.b16 %v182
  %v411 = vunpack.c.l.b16 %v183
  %v412 = vunpack.c.l.b16 %v184
  %v413 = vunpack.c.l.b16 %v185
  %v414 = vunpack.c.l.b16 %v186
  %v415 = vunpack.c.l.b16 %v187
  %v416 = vunpack.c.l.b16 %v188
  %v417 = vpack.c.b16 %v331, %v330
  %v418 = vpack.c.b16 %v333, %v332
  %v419 = vpack.c.b16 %v335, %v334
  %v420 = vpack.c.b16 %v337, %v336
  %v421 = vpack.c.b16 %v339, %v338
  %v422 = vpack.c.b16 %v341, %v340
  %v423 = vpack.c.b16 %v343, %v342
  %v424 = vpack.c.b16 %v345, %v344
  %v425 = vpack.c.b16 %v347, %v346
  %v426 = vpack.c.b16 %v349, %v348
  %v427 = vpack.c.b16 %v351, %v350
  %v428 = vpack.c.b16 %v353, %v352
  %v429 = vpack.c.b16 %v355, %v354
  %v430 = vpack.c.b16 %v357, %v356
  %v431 = vpack.c.b16 %v359, %v358
  %v432 = vpack.c.b16 %v361, %v360
  %v433 = vpack.c.b16 %v363, %v362
  %v434 = vpack.c.b16 %v365, %v364
  %v435 = vpack.c.b16 %v367, %v366
  %v436 = vpack.c.b16 %v369, %v368
  %v437 = vpack.c.b16 %v371, %v370
  %v438 = vpack.c.b16 %v373, %v372
  %v439 = vpack.c.b16 %v375, %v374
  %v440 = vpack.c.b16 %v377, %v376
  %v441 = vpack.c.b16 %v379, %v378
  %v442 = vpack.c.b16 %v381, %v380
  %v443 = vpack.c.b16 %v383, %v382
  %v444 = vpack.c.b16 %v385, %v384
  %v445 = vpack.c.b16 %v387, %v386
  %v446 = vpack.c.b16 %v389, %v388
  %v447 = vpack.c.b16 %v391, %v390
  %v448 = vpack.c.b16 %v393, %v392
  %v449 = vpack.c.b16 %v395, %v394
  %v450 = vpack.c.b16 %v397, %v396
  %v451 = vpack.c.b16 %v399, %v398
  %v452 = vpack.c.b16 %v401, %v400
  %v453 = vpack.c.b16 %v403, %v402
  %v454 = vpack.c.b16 %v405, %v404
  %v455 = vpack.c.b16 %v407, %v406
  %v456 = vpack.c.b16 %v409, %v408
  %v457 = vpack.c.b16 %v411, %v410
  %v458 = vpack.c.b16 %v413, %v412
  %v459 = vpack.c.b16 %v415, %v414
  %v460 = vpack.c.b16 %v416, %v416
  %vm504 = vcmask 433152
  %v506 = vsel %vm504, %v83, 0
  %v509 = vsel %vm504, %v89, 0
  %v512 = vsel %vm504, %v95, 0
  %v515 = vsel %vm504, %v101, 0
  %vm517 = vcmask 1041408
  %v518 = vsel %vm517, 4294967295, 65535
  %v519 = vsel %vm207, %v518, 0
  %v521 = vand.u32 %v460, %v519
  %523 = vmatpush.bf16.msra.mxu0 %v424
  %524 = vmatpush.bf16.msra.mxu0 %v423
  %525 = vmatpush.bf16.msra.mxu0 %v422
  %526 = vmatpush.bf16.msra.mxu0 %v421
  %527 = vmatpush.bf16.msra.mxu0 %v420
  %528 = vmatpush.bf16.msra.mxu0 %v419
  %529 = vmatpush.bf16.msra.mxu0 %v418
  %530 = vmatpush.bf16.msra.mxu0 %v417
  %531 = vmatmul.bf16.gmra.mxu0 %v78
  %v532 = vpop.f32.mrf.mxu0
  %v533 = vadd.f32 %v224, %v532
  %v534 = vpop.f32.mrf.mxu0
  %v535 = vadd.f32 %v226, %v534
  %536 = vmatmul.bf16.gmra.mxu0 %v84
  %v537 = vpop.f32.mrf.mxu0
  %v538 = vadd.f32 %v229, %v537
  %v539 = vpop.f32.mrf.mxu0
  %v540 = vadd.f32 %v231, %v539
  %541 = vmatmul.bf16.gmra.mxu0 %v90
  %v542 = vpop.f32.mrf.mxu0
  %v543 = vadd.f32 %v234, %v542
  %v544 = vpop.f32.mrf.mxu0
  %v545 = vadd.f32 %v236, %v544
  %546 = vmatmul.bf16.gmra.mxu0 %v96
  %v547 = vpop.f32.mrf.mxu0
  %v548 = vadd.f32 %v239, %v547
  %v549 = vpop.f32.mrf.mxu0
  %v550 = vadd.f32 %v241, %v549
  %551 = vdwg.mxu0
  %552 = vmatpush.bf16.msra.mxu0 %v432
  %553 = vmatpush.bf16.msra.mxu0 %v431
  %554 = vmatpush.bf16.msra.mxu0 %v430
  %555 = vmatpush.bf16.msra.mxu0 %v429
  %556 = vmatpush.bf16.msra.mxu0 %v428
  %557 = vmatpush.bf16.msra.mxu0 %v427
  %558 = vmatpush.bf16.msra.mxu0 %v426
  %559 = vmatpush.bf16.msra.mxu0 %v425
  %560 = vmatmul.bf16.gmra.mxu0 %v79
  %v561 = vpop.f32.mrf.mxu0
  %v562 = vadd.f32 %v533, %v561
  %v563 = vpop.f32.mrf.mxu0
  %v564 = vadd.f32 %v535, %v563
  %565 = vmatmul.bf16.gmra.mxu0 %v85
  %v566 = vpop.f32.mrf.mxu0
  %v567 = vadd.f32 %v538, %v566
  %v568 = vpop.f32.mrf.mxu0
  %v569 = vadd.f32 %v540, %v568
  %570 = vmatmul.bf16.gmra.mxu0 %v91
  %v571 = vpop.f32.mrf.mxu0
  %v572 = vadd.f32 %v543, %v571
  %v573 = vpop.f32.mrf.mxu0
  %v574 = vadd.f32 %v545, %v573
  %575 = vmatmul.bf16.gmra.mxu0 %v97
  %v576 = vpop.f32.mrf.mxu0
  %v577 = vadd.f32 %v548, %v576
  %v578 = vpop.f32.mrf.mxu0
  %v579 = vadd.f32 %v550, %v578
  %580 = vdwg.mxu0
  %581 = vmatpush.bf16.msra.mxu0 %v440
  %582 = vmatpush.bf16.msra.mxu0 %v439
  %583 = vmatpush.bf16.msra.mxu0 %v438
  %584 = vmatpush.bf16.msra.mxu0 %v437
  %585 = vmatpush.bf16.msra.mxu0 %v436
  %586 = vmatpush.bf16.msra.mxu0 %v435
  %587 = vmatpush.bf16.msra.mxu0 %v434
  %588 = vmatpush.bf16.msra.mxu0 %v433
  %589 = vmatmul.bf16.gmra.mxu0 %v80
  %v590 = vpop.f32.mrf.mxu0
  %v591 = vadd.f32 %v562, %v590
  %v592 = vpop.f32.mrf.mxu0
  %v593 = vadd.f32 %v564, %v592
  %594 = vmatmul.bf16.gmra.mxu0 %v86
  %v595 = vpop.f32.mrf.mxu0
  %v596 = vadd.f32 %v567, %v595
  %v597 = vpop.f32.mrf.mxu0
  %v598 = vadd.f32 %v569, %v597
  %599 = vmatmul.bf16.gmra.mxu0 %v92
  %v600 = vpop.f32.mrf.mxu0
  %v601 = vadd.f32 %v572, %v600
  %v602 = vpop.f32.mrf.mxu0
  %v603 = vadd.f32 %v574, %v602
  %604 = vmatmul.bf16.gmra.mxu0 %v98
  %v605 = vpop.f32.mrf.mxu0
  %v606 = vadd.f32 %v577, %v605
  %v607 = vpop.f32.mrf.mxu0
  %v608 = vadd.f32 %v579, %v607
  %609 = vdwg.mxu0
  %610 = vmatpush.bf16.msra.mxu0 %v448
  %611 = vmatpush.bf16.msra.mxu0 %v447
  %612 = vmatpush.bf16.msra.mxu0 %v446
  %613 = vmatpush.bf16.msra.mxu0 %v445
  %614 = vmatpush.bf16.msra.mxu0 %v444
  %615 = vmatpush.bf16.msra.mxu0 %v443
  %616 = vmatpush.bf16.msra.mxu0 %v442
  %617 = vmatpush.bf16.msra.mxu0 %v441
  %618 = vmatmul.bf16.gmra.mxu0 %v81
  %v619 = vpop.f32.mrf.mxu0
  %v620 = vadd.f32 %v591, %v619
  %v621 = vpop.f32.mrf.mxu0
  %v622 = vadd.f32 %v593, %v621
  %623 = vmatmul.bf16.gmra.mxu0 %v87
  %v624 = vpop.f32.mrf.mxu0
  %v625 = vadd.f32 %v596, %v624
  %v626 = vpop.f32.mrf.mxu0
  %v627 = vadd.f32 %v598, %v626
  %628 = vmatmul.bf16.gmra.mxu0 %v93
  %v629 = vpop.f32.mrf.mxu0
  %v630 = vadd.f32 %v601, %v629
  %v631 = vpop.f32.mrf.mxu0
  %v632 = vadd.f32 %v603, %v631
  %633 = vmatmul.bf16.gmra.mxu0 %v99
  %v634 = vpop.f32.mrf.mxu0
  %v635 = vadd.f32 %v606, %v634
  %v636 = vpop.f32.mrf.mxu0
  %v637 = vadd.f32 %v608, %v636
  %638 = vdwg.mxu0
  %639 = vmatpush.bf16.msra.mxu0 %v456
  %640 = vmatpush.bf16.msra.mxu0 %v455
  %641 = vmatpush.bf16.msra.mxu0 %v454
  %642 = vmatpush.bf16.msra.mxu0 %v453
  %643 = vmatpush.bf16.msra.mxu0 %v452
  %644 = vmatpush.bf16.msra.mxu0 %v451
  %645 = vmatpush.bf16.msra.mxu0 %v450
  %646 = vmatpush.bf16.msra.mxu0 %v449
  %647 = vmatmul.bf16.gmra.mxu0 %v82
  %v648 = vpop.f32.mrf.mxu0
  %v649 = vadd.f32 %v620, %v648
  %v650 = vpop.f32.mrf.mxu0
  %v651 = vadd.f32 %v622, %v650
  %652 = vmatmul.bf16.gmra.mxu0 %v88
  %v653 = vpop.f32.mrf.mxu0
  %v654 = vadd.f32 %v625, %v653
  %v655 = vpop.f32.mrf.mxu0
  %v656 = vadd.f32 %v627, %v655
  %657 = vmatmul.bf16.gmra.mxu0 %v94
  %v658 = vpop.f32.mrf.mxu0
  %v659 = vadd.f32 %v630, %v658
  %v660 = vpop.f32.mrf.mxu0
  %v661 = vadd.f32 %v632, %v660
  %662 = vmatmul.bf16.gmra.mxu0 %v100
  %v663 = vpop.f32.mrf.mxu0
  %v664 = vadd.f32 %v635, %v663
  %v665 = vpop.f32.mrf.mxu0
  %v666 = vadd.f32 %v637, %v665
  %667 = vdwg.mxu0
  %668 = vmatpush.bf16.msra.mxu0 0
  %669 = vmatpush.bf16.msra.mxu0 0
  %670 = vmatpush.bf16.msra.mxu0 0
  %671 = vmatpush.bf16.msra.mxu0 0
  %672 = vmatpush.bf16.msra.mxu0 %v521
  %673 = vmatpush.bf16.msra.mxu0 %v459
  %674 = vmatpush.bf16.msra.mxu0 %v458
  %675 = vmatpush.bf16.msra.mxu0 %v457
  %676 = vmatmul.bf16.gmra.mxu0 %v506
  %v677 = vpop.f32.mrf.mxu0
  %v678 = vadd.f32 %v649, %v677
  %v679 = vpop.f32.mrf.mxu0
  %v680 = vadd.f32 %v651, %v679
  %681 = vmatmul.bf16.gmra.mxu0 %v509
  %v682 = vpop.f32.mrf.mxu0
  %v683 = vadd.f32 %v654, %v682
  %v684 = vpop.f32.mrf.mxu0
  %v685 = vadd.f32 %v656, %v684
  %686 = vmatmul.bf16.gmra.mxu0 %v512
  %v687 = vpop.f32.mrf.mxu0
  %v688 = vadd.f32 %v659, %v687
  %v689 = vpop.f32.mrf.mxu0
  %v690 = vadd.f32 %v661, %v689
  %691 = vmatmul.bf16.gmra.mxu0 %v515
  %v692 = vpop.f32.mrf.mxu0
  %v693 = vadd.f32 %v664, %v692
  %v694 = vpop.f32.mrf.mxu0
  %v695 = vadd.f32 %v666, %v694
  %696 = vdwg.mxu0
  %v697 = vperm.slane %v18, 0
  %v698 = vadd.f32 %v678, %v697
  %v699 = vadd.f32 %v680, %v697
  %v700 = vadd.f32 %v683, %v697
  %v701 = vadd.f32 %v685, %v697
  %v702 = vadd.f32 %v688, %v697
  %v703 = vadd.f32 %v690, %v697
  %v704 = vadd.f32 %v693, %v697
  %v705 = vadd.f32 %v695, %v697
  %v706 = vmul.f32 %v698, 0.01
  %v707 = vmul.f32 %v699, 0.01
  %v708 = vmul.f32 %v700, 0.01
  %v709 = vmul.f32 %v701, 0.01
  %v710 = vmul.f32 %v702, 0.01
  %v711 = vmul.f32 %v703, 0.01
  %v712 = vmul.f32 %v704, 0.01
  %v713 = vmul.f32 %v705, 0.01
  %v714 = vmax.f32 %v698, %v706
  %v715 = vmax.f32 %v699, %v707
  %v716 = vmax.f32 %v700, %v708
  %v717 = vmax.f32 %v701, %v709
  %v718 = vmax.f32 %v702, %v710
  %v719 = vmax.f32 %v703, %v711
  %v720 = vmax.f32 %v704, %v712
  %v721 = vmax.f32 %v705, %v713
  %v722 = vpack.c.bf16 %v715, %v714
  %v723 = vpack.c.bf16 %v717, %v716
  %v724 = vpack.c.bf16 %v719, %v718
  %v725 = vpack.c.bf16 %v721, %v720
  %v726 = vld [vmem:[%s2 + $0x168] sm:$0xf]
  %v727 = vld [vmem:[%s2 + $0x16c] sm:$0xf]
  %v728 = vld [vmem:[%s2 + $0x170] sm:$0xf]
  %v729 = vld [vmem:[%s2 + $0x174] sm:$0xf]
  %v730 = vld [vmem:[%s2 + $0x178] sm:$0xf]
  %v731 = vld [vmem:[%s2 + $0x17c] sm:$0xf]
  %v732 = vld [vmem:[%s2 + $0x180] sm:$0xf]
  %v733 = vld [vmem:[%s2 + $0x184] sm:$0xf]
  %v734 = vperm.slane %v19, 0
  %v743 = vunpack.c.l.b16 %v726
  %v744 = vunpack.c.l.b16 %v727
  %v745 = vunpack.c.l.b16 %v728
  %v746 = vunpack.c.l.b16 %v729
  %v747 = vunpack.c.l.b16 %v730
  %v748 = vunpack.c.l.b16 %v731
  %v749 = vunpack.c.l.b16 %v732
  %v750 = vunpack.c.l.b16 %v733
  %v751 = vpack.c.b16 %v744, %v743
  %v752 = vpack.c.b16 %v746, %v745
  %v753 = vpack.c.b16 %v748, %v747
  %v754 = vpack.c.b16 %v750, %v749
  %vm759 = vcmask 523264
  %v761 = vsel %vm759, %v722, 0
  %v764 = vsel %vm759, %v723, 0
  %v767 = vsel %vm759, %v724, 0
  %v770 = vsel %vm759, %v725, 0
  %772 = vmatpush.bf16.msra.mxu0 0
  %773 = vmatpush.bf16.msra.mxu0 0
  %774 = vmatpush.bf16.msra.mxu0 0
  %775 = vmatpush.bf16.msra.mxu0 0
  %776 = vmatpush.bf16.msra.mxu0 %v754
  %777 = vmatpush.bf16.msra.mxu0 %v753
  %778 = vmatpush.bf16.msra.mxu0 %v752
  %779 = vmatpush.bf16.msra.mxu0 %v751
  %780 = vmatmul.bf16.gmra.mxu0 %v761
  %v781 = vpop.f32.mrf.mxu0
  %v782 = vadd.f32 %v734, %v781
  %v783 = vpop.f32.mrf.mxu0
  %v784 = vadd.f32 %v734, %v783
  %785 = vmatmul.bf16.gmra.mxu0 %v764
  %v786 = vpop.f32.mrf.mxu0
  %v787 = vadd.f32 %v734, %v786
  %v788 = vpop.f32.mrf.mxu0
  %v789 = vadd.f32 %v734, %v788
  %790 = vmatmul.bf16.gmra.mxu0 %v767
  %v791 = vpop.f32.mrf.mxu0
  %v792 = vadd.f32 %v734, %v791
  %v793 = vpop.f32.mrf.mxu0
  %v794 = vadd.f32 %v734, %v793
  %795 = vmatmul.bf16.gmra.mxu0 %v770
  %v796 = vpop.f32.mrf.mxu0
  %v797 = vadd.f32 %v734, %v796
  %v798 = vpop.f32.mrf.mxu0
  %v799 = vadd.f32 %v734, %v798
  %800 = vdwg.mxu0
  %v801 = vmul.f32 %v782, 0.01
  %v802 = vmul.f32 %v784, 0.01
  %v803 = vmul.f32 %v787, 0.01
  %v804 = vmul.f32 %v789, 0.01
  %v805 = vmul.f32 %v792, 0.01
  %v806 = vmul.f32 %v794, 0.01
  %v807 = vmul.f32 %v797, 0.01
  %v808 = vmul.f32 %v799, 0.01
  %v809 = vmax.f32 %v782, %v801
  %v810 = vmax.f32 %v784, %v802
  %v811 = vmax.f32 %v787, %v803
  %v812 = vmax.f32 %v789, %v804
  %v813 = vmax.f32 %v792, %v805
  %v814 = vmax.f32 %v794, %v806
  %v815 = vmax.f32 %v797, %v807
  %v816 = vmax.f32 %v799, %v808
  %v817 = vperm.slane %v20, 0
  %v818 = vmul.f32 %v809, %v817
  %v819 = vmul.f32 %v810, %v817
  %v820 = vmul.f32 %v811, %v817
  %v821 = vmul.f32 %v812, %v817
  %v822 = vmul.f32 %v813, %v817
  %v823 = vmul.f32 %v814, %v817
  %v824 = vmul.f32 %v815, %v817
  %v825 = vmul.f32 %v816, %v817
  %v826 = vsel %vm759, %v818, 0.0
  %827 = vadd.xlane.f32.xlu0 %v826
  %v828 = vpop.xlane.xlu0 %827
  %v829 = vsel %vm759, %v819, 0.0
  %830 = vadd.xlane.f32.xlu0 %v829
  %v831 = vpop.xlane.xlu0 %830
  %v832 = vsel %vm759, %v820, 0.0
  %833 = vadd.xlane.f32.xlu0 %v832
  %v834 = vpop.xlane.xlu0 %833
  %v835 = vsel %vm759, %v821, 0.0
  %836 = vadd.xlane.f32.xlu0 %v835
  %v837 = vpop.xlane.xlu0 %836
  %v838 = vsel %vm759, %v822, 0.0
  %839 = vadd.xlane.f32.xlu0 %v838
  %v840 = vpop.xlane.xlu0 %839
  %v841 = vsel %vm759, %v823, 0.0
  %842 = vadd.xlane.f32.xlu0 %v841
  %v843 = vpop.xlane.xlu0 %842
  %v844 = vsel %vm759, %v824, 0.0
  %845 = vadd.xlane.f32.xlu0 %v844
  %v846 = vpop.xlane.xlu0 %845
  %v847 = vsel %vm759, %v825, 0.0
  %848 = vadd.xlane.f32.xlu0 %v847
  %v849 = vpop.xlane.xlu0 %848
  %v850 = vperm.slane %v21, 0
  %v851 = vadd.f32 %v828, %v850
  %v852 = vadd.f32 %v831, %v850
  %v853 = vadd.f32 %v834, %v850
  %v854 = vadd.f32 %v837, %v850
  %v855 = vadd.f32 %v840, %v850
  %v856 = vadd.f32 %v843, %v850
  %v857 = vadd.f32 %v846, %v850
  %v858 = vadd.f32 %v849, %v850
  %vm859 = vcmask 7168
  %860 = vst.msk [vmem:[%s4] sm:$0xff] %vm859, %v851
  %861 = vst.msk [vmem:[%s4 + $0x8] sm:$0xff] %vm859, %v852
  %862 = vst.msk [vmem:[%s4 + $0x10] sm:$0xff] %vm859, %v853
  %863 = vst.msk [vmem:[%s4 + $0x18] sm:$0xff] %vm859, %v854
  %864 = vst.msk [vmem:[%s4 + $0x20] sm:$0xff] %vm859, %v855
  %865 = vst.msk [vmem:[%s4 + $0x28] sm:$0xff] %vm859, %v856
  %866 = vst.msk [vmem:[%s4 + $0x30] sm:$0xff] %vm859, %v857
  %867 = vst.msk [vmem:[%s4 + $0x38] sm:$0xff] %vm859, %v858
  // Predicated region
  $region18: #{tpu_custom_call.1} parent=0 // pred_check
    _
  $region19: #{tpu_custom_call.1} parent=0 // pred_check_branch
    %869 = sbr.rel (0) target = $region21
  $region20: #{tpu_custom_call.1} parent=0 // pred_region
    _
  $region21: #{tpu_custom_call.1} parent=0 // pred_fallthru
    _
  // Predicated region
  $region22: #{tpu_custom_call.1} parent=0 // pred_check
    _
  $region23: #{tpu_custom_call.1} parent=0 // pred_check_branch
    %871 = sbr.rel (0) target = $region25
  $region24: #{tpu_custom_call.1} parent=0 // pred_region
    _
  $region25: #{tpu_custom_call.1} parent=0 // pred_fallthru
    _

</llo_original>
